<compile_context>
chip_gen: v5e
topology: v5e:2x2
jax: 0.10.0
libtpu: 0.0.40
codegen_flags: <defaults>
</compile_context>

<pallas_src>
import functools

import jax
import jax.numpy as jnp
from jax.experimental import pallas as pl
from jax.experimental.pallas import tpu as pltpu


def _biasfree_ln_kernel(x_ref, w_ref, o_ref, *, native_dtype_scale):
    """x_ref: (1, C, T) block (C on sublanes, T spatial on lanes).
    w_ref: (1, C, 1) per-channel scale.  o_ref: (1, C, T)."""
    x = x_ref[...]
    xf = x.astype(jnp.float32)
    c = xf.shape[-2]
    inv_c = 1.0 / c
    # Single-pass fused statistics over the channel (sublane) axis.
    s1 = jnp.sum(xf, axis=-2, keepdims=True)
    s2 = jnp.sum(xf * xf, axis=-2, keepdims=True)
    mu = s1 * inv_c
    var = jnp.maximum(s2 * inv_c - mu * mu, 0.0)  # clamp: cancellation safety
    inv_std = jax.lax.rsqrt(var + 1e-5)           # EUP slot; shape (1, 1, T)
    if native_dtype_scale:
        # bf16 path (v6e/v7x): stats are f32 above; final multiplies + store in
        # the input dtype halve vreg pressure and VMEM temporaries.
        o_ref[...] = (x * inv_std.astype(x.dtype)) * w_ref[...].astype(x.dtype)
    else:
        w = w_ref[...].astype(jnp.float32)        # (1, C, 1) lane-broadcast
        o_ref[...] = (xf * inv_std * w).astype(o_ref.dtype)


def _pick_tile_hw(hw_pad, c, itemsize):
    """Largest multiple-of-128 divisor of hw_pad whose block (counting the
    in-kernel f32 temporaries and double-buffered I/O) fits a ~30 MiB VMEM
    budget — safe on v7x's 64 MiB physical VMEM, generous on v5e/v6e."""
    f32_per_in_byte = 4.0 / itemsize
    # 2x input + 2x output buffers (double-buffered) + ~3 full-tile f32 temps.
    per_block_cost = 4.0 + 3.0 * f32_per_in_byte
    target_bytes = int((30 * (1 << 20)) // per_block_cost)
    target_bytes = min(target_bytes, 4 << 20)     # ~2-4 MiB sweet spot
    max_lanes = max(128, ((target_bytes // max(1, c * itemsize)) // 128) * 128)
    best = 128
    for cand in range(128, min(hw_pad, max_lanes) + 1, 128):
        if hw_pad % cand == 0:
            best = cand
    return best


@jax.jit
def biasfree_layernorm_pallas(x_nchw, weight):
    """x_nchw: (B, C, H, W);  weight: (C,).  Returns (B, C, H, W)."""
    B, C, H, W = x_nchw.shape
    HW = H * W
    itemsize = jnp.dtype(x_nchw.dtype).itemsize

    # Contiguous dim-merge (free).  Pad the merged spatial axis to a multiple
    # of 128 so every block is lane-dense and bounded; padded (zero) columns
    # are normalized independently and sliced off afterwards, so semantics are
    # unchanged and no NaNs can appear (var=0 -> rsqrt(1e-5) * 0 = 0).
    x3 = x_nchw.reshape(B, C, HW)
    HW_pad = ((HW + 127) // 128) * 128
    if HW_pad != HW:
        x3 = jnp.pad(x3, ((0, 0), (0, 0), (0, HW_pad - HW)))
    w3 = weight.reshape(1, C, 1)

    tile_hw = _pick_tile_hw(HW_pad, C, itemsize)
    grid = (B, HW_pad // tile_hw)

    # bf16 inputs: do the final scale in bf16 (good on v6e/v7x VALU); stats
    # remain f32 either way.  f32 inputs keep the full f32 path (v5e-safe).
    native_dtype_scale = (x_nchw.dtype == jnp.bfloat16)

    # VMEM budget: double-buffered in/out blocks + in-kernel f32 temporaries
    # (x_f32, x*x, y) + resident weight + slack.  Capped at 32 MiB (v7x-safe)
    # unless a single minimal block genuinely needs more (huge-C edge case).
    block_bytes = C * tile_hw * itemsize
    f32_tmp_bytes = 3 * C * tile_hw * 4
    needed = 4 * block_bytes + f32_tmp_bytes + 2 * C * itemsize + (2 << 20)
    if needed <= (32 << 20):
        vmem_limit = int(max(16 << 20, needed))
    else:
        vmem_limit = int(needed)

    kernel = functools.partial(
        _biasfree_ln_kernel, native_dtype_scale=native_dtype_scale
    )

    y3 = pl.pallas_call(
        kernel,
        out_shape=jax.ShapeDtypeStruct((B, C, HW_pad), x_nchw.dtype),
        grid_spec=pltpu.PrefetchScalarGridSpec(
            num_scalar_prefetch=0,
            grid=grid,
            in_specs=[
                pl.BlockSpec((1, C, tile_hw), lambda b, j: (b, 0, j)),
                pl.BlockSpec((1, C, 1), lambda b, j: (0, 0, 0)),
            ],
            out_specs=pl.BlockSpec((1, C, tile_hw), lambda b, j: (b, 0, j)),
        ),
        compiler_params=pltpu.CompilerParams(
            dimension_semantics=("parallel", "parallel"),
            vmem_limit_bytes=vmem_limit,
        ),
    )(x3, w3)

    if HW_pad != HW:
        y3 = y3[:, :, :HW]
    return y3.reshape(B, C, H, W)


def _reference(x_nchw, weight):
    """Pure-JAX reference of the module applied over channels (to_3d view)."""
    x = x_nchw.astype(jnp.float32)
    mu = jnp.mean(x, axis=1, keepdims=True)
    var = jnp.mean((x - mu) ** 2, axis=1, keepdims=True)  # unbiased=False
    y = x / jnp.sqrt(var + 1e-5) * weight.reshape(1, -1, 1, 1).astype(jnp.float32)
    return y.astype(x_nchw.dtype)


if __name__ == "__main__":
    key = jax.random.PRNGKey(0)
    kx, kw, kx2 = jax.random.split(key, 3)

    B, C, H, W = 2, 4, 16, 16
    x = jax.random.normal(kx, (B, C, H, W), dtype=jnp.float32)

    # Module init: weight = ones(C).  Also a non-trivial weight to exercise
    # the per-channel scaling / broadcast path.
    w_init = jnp.ones((C,), dtype=jnp.float32)
    w_rand = jax.random.normal(kw, (C,), dtype=jnp.float32)

    ok = True
    for w in (w_init, w_rand):
        y = jax.block_until_ready(biasfree_layernorm_pallas(x, w))
        y_ref = _reference(x, w)
        if not jnp.allclose(y, y_ref, atol=1e-5, rtol=1e-5):
            ok = False

    # Non-128-aligned spatial extent exercises the pad-and-slice path.
    x_odd = jax.random.normal(kx2, (B, C, 10, 10), dtype=jnp.float32)
    y_odd = jax.block_until_ready(biasfree_layernorm_pallas(x_odd, w_rand))
    if not jnp.allclose(y_odd, _reference(x_odd, w_rand), atol=1e-5, rtol=1e-5):
        ok = False

    if ok:
        print("KERNEL_OK")
</pallas_src>

<mosaic_0001>
module attributes {stable_mosaic.version = 11 : i64} {
  func.func @_biasfree_ln_kernel(%arg0: i32, %arg1: i32, %arg2: memref<1x4x256xf32, #tpu.memory_space<vmem>>, %arg3: memref<1x4x1xf32, #tpu.memory_space<vmem>>, %arg4: memref<1x4x256xf32, #tpu.memory_space<vmem>>) attributes {dimension_semantics = [#tpu.dimension_semantics<parallel>, #tpu.dimension_semantics<parallel>], iteration_bounds = array<i64: 2, 1>, scalar_prefetch = 0 : i64, scratch_operands = 0 : i64, tpu.core_type = #tpu.core_type<tc>, window_params = [{transform_indices = @transform_0, window_bounds = array<i64: 1, 4, 256>}, {pipeline_mode = #tpu.pipeline_mode<synchronous>, transform_indices = @transform_1, window_bounds = array<i64: 1, 4, 1>}, {transform_indices = @transform_2, window_bounds = array<i64: 1, 4, 256>}]} {
    %c0 = arith.constant 0 : index
    %c0_0 = arith.constant 0 : index
    %c0_1 = arith.constant 0 : index
    %0 = vector.load %arg2[%c0, %c0_0, %c0_1] : memref<1x4x256xf32, #tpu.memory_space<vmem>>, vector<1x4x256xf32>
    %cst = arith.constant dense<0.000000e+00> : vector<1x256xf32>
    %1 = vector.multi_reduction <add>, %0, %cst [1] : vector<1x4x256xf32> to vector<1x256xf32>
    %2 = vector.shape_cast %1 : vector<1x256xf32> to vector<1x1x256xf32>
    %3 = arith.mulf %0, %0 : vector<1x4x256xf32>
    %cst_2 = arith.constant dense<0.000000e+00> : vector<1x256xf32>
    %4 = vector.multi_reduction <add>, %3, %cst_2 [1] : vector<1x4x256xf32> to vector<1x256xf32>
    %5 = vector.shape_cast %4 : vector<1x256xf32> to vector<1x1x256xf32>
    %cst_3 = arith.constant 2.500000e-01 : f32
    %6 = vector.broadcast %cst_3 : f32 to vector<1x1x256xf32>
    %7 = arith.mulf %2, %6 : vector<1x1x256xf32>
    %cst_4 = arith.constant 2.500000e-01 : f32
    %8 = vector.broadcast %cst_4 : f32 to vector<1x1x256xf32>
    %9 = arith.mulf %5, %8 : vector<1x1x256xf32>
    %10 = arith.mulf %7, %7 : vector<1x1x256xf32>
    %11 = arith.subf %9, %10 : vector<1x1x256xf32>
    %cst_5 = arith.constant 0.000000e+00 : f32
    %12 = vector.broadcast %cst_5 : f32 to vector<1x1x256xf32>
    %13 = arith.maximumf %11, %12 : vector<1x1x256xf32>
    %cst_6 = arith.constant 9.99999974E-6 : f32
    %14 = vector.broadcast %cst_6 : f32 to vector<1x1x256xf32>
    %15 = arith.addf %13, %14 : vector<1x1x256xf32>
    %16 = math.rsqrt %15 : vector<1x1x256xf32>
    %c0_7 = arith.constant 0 : index
    %c0_8 = arith.constant 0 : index
    %c0_9 = arith.constant 0 : index
    %17 = vector.load %arg3[%c0_7, %c0_8, %c0_9] : memref<1x4x1xf32, #tpu.memory_space<vmem>>, vector<1x4x1xf32>
    %18 = vector.broadcast %16 : vector<1x1x256xf32> to vector<1x4x256xf32>
    %19 = arith.mulf %0, %18 : vector<1x4x256xf32>
    %20 = vector.broadcast %17 : vector<1x4x1xf32> to vector<1x4x256xf32>
    %21 = arith.mulf %19, %20 : vector<1x4x256xf32>
    %c0_10 = arith.constant 0 : index
    %c0_11 = arith.constant 0 : index
    %c0_12 = arith.constant 0 : index
    %22 = vector.load %arg4[%c0_10, %c0_11, %c0_12] : memref<1x4x256xf32, #tpu.memory_space<vmem>>, vector<1x4x256xf32>
    tpu.vector_store %arg4[%c0_10, %c0_11, %c0_12], %21 {strides = array<i32>} : memref<1x4x256xf32, #tpu.memory_space<vmem>>, vector<1x4x256xf32>,
    return
  }
  func.func @transform_0(%arg0: i32, %arg1: i32) -> (i32, i32, i32) {
    %c0_i32 = arith.constant 0 : i32
    %c0_i32_0 = arith.constant 0 : i32
    return %arg0, %c0_i32, %arg1 : i32, i32, i32
  }
  func.func @transform_1(%arg0: i32, %arg1: i32) -> (i32, i32, i32) {
    %c0_i32 = arith.constant 0 : i32
    %c0_i32_0 = arith.constant 0 : i32
    %c0_i32_1 = arith.constant 0 : i32
    %c0_i32_2 = arith.constant 0 : i32
    return %c0_i32, %c0_i32_0, %c0_i32_1 : i32, i32, i32
  }
  func.func @transform_2(%arg0: i32, %arg1: i32) -> (i32, i32, i32) {
    %c0_i32 = arith.constant 0 : i32
    %c0_i32_0 = arith.constant 0 : i32
    return %arg0, %c0_i32, %arg1 : i32, i32, i32
  }
}

</mosaic_0001>

<llo_original>
// kernel: biasfree_layernorm_pallas.1
$region0: #{biasfree_layernorm_pallas.1}
  #allocation0 [shape = 'u32[]', space=smem, size = 0x4, offset = 0x4, fixed_abs, tag = 'smem constant byte address 0x4 - core index']
  #allocation1 [shape = 'u32[72,128]{1,0:T(1,128)}', space=vmem, size = 0x9000, scoped, tag = 'internal scratch']
  %s0 = inlined_call_operand.vmem [shape: f32[2,4,256], index: 0, kind: input, shape index: {}]
  %s1 = inlined_call_operand.vmem [shape: f32[1,4,1], index: 1, kind: input, shape index: {}]
  %s2 = inlined_call_operand.vmem [shape: f32[2,4,256], index: 2, kind: output, shape index: {}]
  %s3 = sld [smem:[#allocation0]]
  $region41: #{biasfree_layernorm_pallas.1} parent=0
    _
  %s5 = ssub.s32 1, %s3
  %s6 = scalar_select 0, %s5, %s3
  loop: start=0, step=1, limit=4
  $region2: #{biasfree_layernorm_pallas.1} parent=0 // loop_pre_header
    _
  $region3: #{biasfree_layernorm_pallas.1} parent=0 // loop_header
    %s8 = sphi 0, %s12
    %p9 = scmp.ge.s32.totalorder %s8, 4
    %s15 = sphi 0, %s27
    %s16 = sphi 0, %s23
    %s17 = sphi 0, %s15
    %s18 = sphi 0, %s16
    %s19 = sphi 0, %s17
    %s20 = sphi 0, %s18
    %s32 = sphi 0, %s34
    %s35 = sphi 0, %s32
    %s36 = sphi 0, %s35
    %s52 = sphi 0, %s36
    %s56 = sphi 0, %s56
    %s58 = sphi 0, %s56
    %s59 = sphi 0, %s58
    %s73 = sphi 0, %s59
    %s81 = sphi 0, %s83
    %s84 = sphi 0, %s81
    %s85 = sphi 0, %s84
    %s101 = sphi 0, %s85
  $region4: #{biasfree_layernorm_pallas.1} parent=0 // loop_header_branch
    %11 = sbr.rel (%p9) target = $region8
  $region5: #{biasfree_layernorm_pallas.1} parent=0 // loop_body
    %s13 = ssub.s32 %s8, 1
    %s14 = ssub.s32 %s8, 2
    %s21 = sadd.s32 1, %s16
    %p22 = scmp.ge.s32.totalorder %s21, 1
    %s23 = scalar_select %p22, 0, %s21
    %s24 = sadd.s32 1, %s15
    %s25 = scalar_select %p22, %s24, %s15
    %p26 = scmp.ge.s32.totalorder %s25, 2
    %s27 = scalar_select %p26, 0, %s25
    %s28 = ssub.s32 %s15, %s27
    %s29 = ssub.s32 %s16, %s23
    %s30 = sor.u32 %s28, %s29
    %p31 = scmp.eq.s32.totalorder %s30, 0
    %s33 = sadd.s32 %s32, 1
    %s34 = scalar_select %p31, %s32, %s33
    %p37 = pneg %p31
    %p38 = scmp.eq.s32.totalorder %s8, 1
    %p39 = por %p37, %p38
    %p40 = scmp.ne.s32.totalorder %s32, %s35
    %p41 = scmp.eq.s32.totalorder %s8, 0
    %p42 = por %p40, %p41
    %p43 = scmp.ne.s32.totalorder %s32, %s35
    %p44 = scmp.eq.s32.totalorder %s13, 1
    %p45 = por %p43, %p44
    %p46 = scmp.ne.s32.totalorder %s35, %s36
    %p47 = scmp.eq.s32.totalorder %s13, 0
    %p48 = por %p46, %p47
    %p49 = scmp.ne.s32.totalorder %s35, %s36
    %p50 = scmp.eq.s32.totalorder %s14, 1
    %p51 = por %p49, %p50
    %p53 = scmp.ne.s32.totalorder %s36, %s52
    %p54 = scmp.eq.s32.totalorder %s14, 0
    %p55 = por %p53, %p54
    %s57 = sadd.s32 %s56, 1
    %p60 = scmp.eq.s32.totalorder %s8, 1
    %p61 = scmp.ne.s32.totalorder %s56, %s58
    %p62 = scmp.eq.s32.totalorder %s8, 0
    %p63 = por %p61, %p62
    %p64 = scmp.ne.s32.totalorder %s56, %s58
    %p65 = scmp.eq.s32.totalorder %s13, 1
    %p66 = por %p64, %p65
    %p67 = scmp.ne.s32.totalorder %s58, %s59
    %p68 = scmp.eq.s32.totalorder %s13, 0
    %p69 = por %p67, %p68
    %p70 = scmp.ne.s32.totalorder %s58, %s59
    %p71 = scmp.eq.s32.totalorder %s14, 1
    %p72 = por %p70, %p71
    %p74 = scmp.ne.s32.totalorder %s59, %s73
    %p75 = scmp.eq.s32.totalorder %s14, 0
    %p76 = por %p74, %p75
    %s77 = ssub.s32 %s15, %s27
    %s78 = ssub.s32 %s16, %s23
    %s79 = sor.u32 %s77, %s78
    %p80 = scmp.eq.s32.totalorder %s79, 0
    %s82 = sadd.s32 %s81, 1
    %s83 = scalar_select %p80, %s81, %s82
    %p86 = pneg %p80
    %p87 = scmp.eq.s32.totalorder %s8, 1
    %p88 = por %p86, %p87
    %p89 = scmp.ne.s32.totalorder %s81, %s84
    %p90 = scmp.eq.s32.totalorder %s8, 0
    %p91 = por %p89, %p90
    %p92 = scmp.ne.s32.totalorder %s81, %s84
    %p93 = scmp.eq.s32.totalorder %s13, 1
    %p94 = por %p92, %p93
    %p95 = scmp.ne.s32.totalorder %s84, %s85
    %p96 = scmp.eq.s32.totalorder %s13, 0
    %p97 = por %p95, %p96
    %p98 = scmp.ne.s32.totalorder %s84, %s85
    %p99 = scmp.eq.s32.totalorder %s14, 1
    %p100 = por %p98, %p99
    %p102 = scmp.ne.s32.totalorder %s85, %s101
    %p103 = scmp.eq.s32.totalorder %s14, 0
    %p104 = por %p102, %p103
    %p105 = scmp.le.s32.totalorder 1, %s8
    %p106 = scmp.lt.s32.totalorder %s8, 3
    %p107 = pnand %p105, %p106
    %p108 = pneg %p107
    // Predicated region
    $region9: #{biasfree_layernorm_pallas.1} parent=5 // pred_check
      _
    $region10: #{biasfree_layernorm_pallas.1} parent=5 // pred_check_branch
      %110 = sbr.rel (%p107) target = $region12
    $region11: #{biasfree_layernorm_pallas.1} parent=5 // pred_region
      %s111 = ssub.s32 %s8, 1
      // Predicated region
      $region13: #{biasfree_layernorm_pallas.1} parent=11 // pred_check
        %p112 = pneg %p69
      $region14: #{biasfree_layernorm_pallas.1} parent=11 // pred_check_branch
        %114 = sbr.rel (%p112) target = $region16
      $region15: #{biasfree_layernorm_pallas.1} parent=11 // pred_region
        _
      $region16: #{biasfree_layernorm_pallas.1} parent=11 // pred_fallthru
        _
    $region12: #{biasfree_layernorm_pallas.1} parent=5 // pred_fallthru
      _
    %p115 = scmp.lt.s32.totalorder %s8, 2
    // Predicated region
    $region17: #{biasfree_layernorm_pallas.1} parent=5 // pred_check
      %p116 = pneg %p115
    $region18: #{biasfree_layernorm_pallas.1} parent=5 // pred_check_branch
      %118 = sbr.rel (%p116) target = $region20
    $region19: #{biasfree_layernorm_pallas.1} parent=5 // pred_region
      // Predicated region
      $region21: #{biasfree_layernorm_pallas.1} parent=19 // pred_check
        %p119 = pneg %p42
      $region22: #{biasfree_layernorm_pallas.1} parent=19 // pred_check_branch
        %121 = sbr.rel (%p119) target = $region24
      $region23: #{biasfree_layernorm_pallas.1} parent=19 // pred_region
        %s122 = smul.u32 2, %s16
        %p123 = scmp.lt.s32.totalorder %s15, 1
        %s124 = scalar_select %p123, %s15, 1
        %p125 = scmp.lt.s32.totalorder %s122, 1
        %s126 = scalar_select %p125, %s122, 1
        %s127 = smul.addr %s124, 2
        %s128 = sadd.s32 %s126, %s127
        %s129 = smul.addr %s128, 4
        %s130 = scalar_lea.vmem %s0, %s129
        %s131 = smul.u32 2, %s16
      $region24: #{biasfree_layernorm_pallas.1} parent=19 // pred_fallthru
        _
    $region20: #{biasfree_layernorm_pallas.1} parent=5 // pred_fallthru
      _
    %p132 = scmp.le.s32.totalorder 1, %s8
    %p133 = scmp.lt.s32.totalorder %s8, 3
    %p134 = pnand %p132, %p133
    %p135 = pneg %p134
    // Predicated region
    $region25: #{biasfree_layernorm_pallas.1} parent=5 // pred_check
      _
    $region26: #{biasfree_layernorm_pallas.1} parent=5 // pred_check_branch
      %137 = sbr.rel (%p134) target = $region28
    $region27: #{biasfree_layernorm_pallas.1} parent=5 // pred_region
      %s138 = ssub.s32 %s8, 1
      %s139 = smul.u32 2, %s18
      %p140 = scmp.lt.s32.totalorder %s17, 1
      %s141 = scalar_select %p140, %s17, 1
      %p142 = scmp.lt.s32.totalorder %s139, 1
      %s143 = scalar_select %p142, %s139, 1
      %s144 = smul.addr %s141, 2
      %s145 = sadd.s32 %s143, %s144
      %s146 = smul.addr %s145, 4
      %s147 = scalar_lea.vmem %s0, %s146
      %p148 = pneg %p48
      %p149 = pneg %p45
      %p150 = pneg %p69
      %p151 = pneg %p66
      %p152 = pneg %p97
      %p153 = pneg %p94
      %s154 = smul.u32 2, %s18
      %p155 = scmp.lt.s32.totalorder %s17, 1
      %s156 = scalar_select %p155, %s17, 1
      %p157 = scmp.lt.s32.totalorder %s154, 1
      %s158 = scalar_select %p157, %s154, 1
      %s159 = smul.addr %s156, 2
      %s160 = sadd.s32 %s158, %s159
      %s161 = smul.addr %s160, 4
      %s162 = scalar_lea.vmem %s2, %s161
      %s163 = smul.u32 2, %s18
      %p164 = scmp.lt.s32.totalorder %s17, 1
      %s165 = scalar_select %p164, %s17, 1
      %p166 = scmp.lt.s32.totalorder %s163, 1
      %s167 = scalar_select %p166, %s163, 1
      %s168 = smul.addr %s165, 2
      %s169 = sadd.s32 %s167, %s168
      %s170 = smul.addr %s169, 4
      %s171 = scalar_lea.vmem %s0, %s170
      %s172 = smul.u32 2, %s18
      %s173 = smul.u32 2, %s18
      %p174 = scmp.lt.s32.totalorder %s17, 1
      %s175 = scalar_select %p174, %s17, 1
      %p176 = scmp.lt.s32.totalorder %s173, 1
      %s177 = scalar_select %p176, %s173, 1
      %s178 = smul.addr %s175, 2
      %s179 = sadd.s32 %s177, %s178
      %s180 = smul.addr %s179, 4
      %s181 = scalar_lea.vmem %s2, %s180
      %s182 = smul.u32 2, %s18
      %v183 = vld [vmem:[%s171] sm:$0xff]
      %185 = vst [vmem:[#allocation1] ss:$2 sm:$0xff] %v183
      %v186 = vld.sshfl [vmem:[#allocation1] sm:$0xff pattern:$0x75316420]
      %v187 = vld.sshfl [vmem:[#allocation1 + $0x8] sm:$0xff pattern:$0x75316420]
      %vm190 = vcmask 1043456
      %v191 = vsel %vm190, %v186, 0.0
      %v192 = vrot.slane %v191, 4
      %v193 = vadd.f32 %v191, %v192
      %v194 = vrot.slane %v193, 2
      %v195 = vadd.f32 %v193, %v194
      %v196 = vrot.slane %v195, 1
      %v197 = vadd.f32 %v195, %v196
      %v198 = vsel %vm190, %v187, 0.0
      %v199 = vrot.slane %v198, 4
      %v200 = vadd.f32 %v198, %v199
      %v201 = vrot.slane %v200, 2
      %v202 = vadd.f32 %v200, %v201
      %v203 = vrot.slane %v202, 1
      %v204 = vadd.f32 %v202, %v203
      %v205 = vmul.f32 %v183, %v183
      %207 = vst [vmem:[#allocation1] ss:$2 sm:$0xff] %v205
      %v208 = vld.sshfl [vmem:[#allocation1] sm:$0xff pattern:$0x75316420]
      %v209 = vld.sshfl [vmem:[#allocation1 + $0x8] sm:$0xff pattern:$0x75316420]
      %v212 = vsel %vm190, %v208, 0.0
      %v213 = vrot.slane %v212, 4
      %v214 = vadd.f32 %v212, %v213
      %v215 = vrot.slane %v214, 2
      %v216 = vadd.f32 %v214, %v215
      %v217 = vrot.slane %v216, 1
      %v218 = vadd.f32 %v216, %v217
      %v219 = vsel %vm190, %v209, 0.0
      %v220 = vrot.slane %v219, 4
      %v221 = vadd.f32 %v219, %v220
      %v222 = vrot.slane %v221, 2
      %v223 = vadd.f32 %v221, %v222
      %v224 = vrot.slane %v223, 1
      %v225 = vadd.f32 %v223, %v224
      %v226 = vmul.f32 %v197, 0.25
      %v227 = vmul.f32 %v204, 0.25
      %v228 = vmul.f32 %v218, 0.25
      %v229 = vmul.f32 %v225, 0.25
      %v230 = vmul.f32 %v226, %v226
      %v231 = vmul.f32 %v227, %v227
      %v232 = vsub.f32 %v228, %v230
      %v233 = vsub.f32 %v229, %v231
      %v234 = vmax.f32 %v232, 0.0
      %v235 = vmax.f32 %v233, 0.0
      %v236 = vadd.f32 %v234, 1e-05
      %v237 = vadd.f32 %v235, 1e-05
      %v238 = vrsqrt.pop %v236
      %v239 = vmul.f32 %v238, %v236
      %v240 = vmul.f32 %v239, %v238
      %v241 = vmul.f32 0.5, %v240
      %v242 = vsub.f32 1.5, %v241
      %v243 = vmul.f32 %v238, %v242
      %vm244 = vweird.f32 %v236
      %vm245 = vweird.f32 %v238
      %vm246 = vmor %vm244, %vm245
      %v247 = vsel %vm246, %v238, %v243
      %v248 = vrsqrt.pop %v237
      %v249 = vmul.f32 %v248, %v237
      %v250 = vmul.f32 %v249, %v248
      %v251 = vmul.f32 0.5, %v250
      %v252 = vsub.f32 1.5, %v251
      %v253 = vmul.f32 %v248, %v252
      %vm254 = vweird.f32 %v237
      %vm255 = vweird.f32 %v248
      %vm256 = vmor %vm254, %vm255
      %v257 = vsel %vm256, %v248, %v253
      %v258 = vld [vmem:[%s1] sm:$0xf]
      %v261 = vrot.slane %v257, 4
      %v262 = vsel %vm190, %v247, %v261
      %v264 = vmul.f32 %v183, %v262
      %266 = vset.pattern.permute.xlu0 0
      %267 = vperm.xlu0 %266, %v258
      %v268 = vpop.permute.xlu0 %267
      %v270 = vunpack.c.l.s4 839922192
      %v271 = vunpack.c.0.s8 %v270
      %v272 = vperm.slane %v268, %v271
      %v274 = vmul.f32 %v264, %v272
      %275 = vst [vmem:[%s181] sm:$0xff] %v274
      %s276 = smul.u32 2, %s18
      %p277 = scmp.lt.s32.totalorder %s17, 1
      %s278 = scalar_select %p277, %s17, 1
      %p279 = scmp.lt.s32.totalorder %s276, 1
      %s280 = scalar_select %p279, %s276, 1
      %s281 = smul.addr %s278, 2
      %s282 = sadd.s32 %s280, %s281
      %s283 = smul.addr %s282, 4
      %s284 = scalar_lea.vmem %s2, %s283
      // Predicated region
      $region29: #{biasfree_layernorm_pallas.1} parent=27 // pred_check
        %p285 = pneg %p94
      $region30: #{biasfree_layernorm_pallas.1} parent=27 // pred_check_branch
        %287 = sbr.rel (%p285) target = $region32
      $region31: #{biasfree_layernorm_pallas.1} parent=27 // pred_region
        %s288 = smul.u32 2, %s18
      $region32: #{biasfree_layernorm_pallas.1} parent=27 // pred_fallthru
        _
    $region28: #{biasfree_layernorm_pallas.1} parent=5 // pred_fallthru
      _
    %p289 = scmp.le.s32.totalorder 2, %s8
    // Predicated region
    $region33: #{biasfree_layernorm_pallas.1} parent=5 // pred_check
      %p290 = pneg %p289
    $region34: #{biasfree_layernorm_pallas.1} parent=5 // pred_check_branch
      %292 = sbr.rel (%p290) target = $region36
    $region35: #{biasfree_layernorm_pallas.1} parent=5 // pred_region
      %s293 = ssub.s32 %s8, 2
      // Predicated region
      $region37: #{biasfree_layernorm_pallas.1} parent=35 // pred_check
        %p294 = pneg %p100
      $region38: #{biasfree_layernorm_pallas.1} parent=35 // pred_check_branch
        %296 = sbr.rel (%p294) target = $region40
      $region39: #{biasfree_layernorm_pallas.1} parent=35 // pred_region
        %s297 = smul.u32 2, %s20
        %p298 = scmp.lt.s32.totalorder %s19, 1
        %s299 = scalar_select %p298, %s19, 1
        %p300 = scmp.lt.s32.totalorder %s297, 1
        %s301 = scalar_select %p300, %s297, 1
        %s302 = smul.addr %s299, 2
        %s303 = sadd.s32 %s301, %s302
        %s304 = smul.addr %s303, 4
        %s305 = scalar_lea.vmem %s2, %s304
      $region40: #{biasfree_layernorm_pallas.1} parent=35 // pred_fallthru
        _
    $region36: #{biasfree_layernorm_pallas.1} parent=5 // pred_fallthru
      _
  $region6: #{biasfree_layernorm_pallas.1} parent=0 // loop_footer
    %s12 = sadd.s32 1, %s8
  $region7: #{biasfree_layernorm_pallas.1} parent=0 // loop_footer_branch
    %7 = sbr.rel target = $region3
  $region8: #{biasfree_layernorm_pallas.1} parent=0 // loop_exit
    _

</llo_original>
